<compile_context>
chip_gen: v6e
topology: v6e:2x2x1
jax: 0.10.0
libtpu: 0.0.40
codegen_flags: <defaults>
</compile_context>

<pallas_src>
import jax
import jax.numpy as jnp
from jax.experimental import pallas as pl
from jax.experimental.pallas import tpu as pltpu

LANE = 128
SUBLANE = 8
MAX_BLOCK_ROWS = 4096              # up to 2 MiB per f32 stream block
_MIB = 1024 * 1024


def _round_down(x, m):
    return (x // m) * m


def _tpu_config():
    """(num_cores, double-buffered stream byte budget, vmem_limit_bytes or None)."""
    kind = ""
    try:
        kind = jax.devices()[0].device_kind.lower()
    except Exception:
        pass
    if "v7" in kind:
        # 2 TensorCores / chip, 64 MiB VMEM per TC: shard row-blocks across cores.
        return 2, 16 * _MIB, 40 * _MIB
    if "v6" in kind or "v5" in kind:
        # Single TensorCore, 128 MiB physical VMEM; raise the scoped limit so the
        # bigger double-buffered blocks are admitted (v5e default is only 16 MiB).
        return 1, 16 * _MIB, 40 * _MIB
    # Unknown / older generation: stay under the default scoped VMEM limit.
    return 1, 6 * _MIB, None


def _make_mse_kernel(num_inputs, has_mask, br, rows, rh, num_cores,
                     num_blocks, has_partial_last, has_overflow):
    """Grid (core?, row_block): o_ref[core, k] accumulates per-input (8,128) partial
    sums of squared error; cross-lane reduction happens in the wrapper epilogue."""
    full_blocks = num_blocks - (1 if has_partial_last else 0)

    def kernel(*refs):
        x_refs = refs[:num_inputs]
        t_ref = refs[num_inputs]
        m_ref = refs[num_inputs + 1] if has_mask else None
        o_ref = refs[-1]

        if num_cores > 1:
            c = pl.program_id(0)
            r = pl.program_id(1)
            g = c * rh + r          # global row-block index (may exceed num_blocks)
        else:
            r = pl.program_id(0)
            g = r

        @pl.when(r == 0)
        def _():
            o_ref[...] = jnp.zeros_like(o_ref)

        def accumulate(mask_tail_rows):
            t = t_ref[...].astype(jnp.float32)
            if has_mask:
                m = m_ref[...].astype(jnp.float32)
            if mask_tail_rows:
                row_ids = (jax.lax.broadcasted_iota(jnp.int32, (br, LANE), 0)
                           + g * br)
                valid = row_ids < rows
            for k in range(num_inputs):
                x = x_refs[k][...].astype(jnp.float32)
                d = x * m - t if has_mask else x - t
                sq = d * d
                if mask_tail_rows:
                    sq = jnp.where(valid, sq, jnp.float32(0.0))
                # Row-only reduce over aligned (8,128) vregs (pure VPU adds).
                o_ref[0, k] += jnp.sum(
                    sq.reshape(br // SUBLANE, SUBLANE, LANE), axis=0)

        if not has_partial_last and not has_overflow:
            # Fast path: every grid step is a full, in-range block — no masking work.
            accumulate(False)
        else:
            @pl.when(g < full_blocks)
            def _():
                accumulate(False)          # interior blocks stay unmasked

            if has_partial_last:
                @pl.when(g == full_blocks)
                def _():
                    accumulate(True)       # the single ragged last block
            # Overflow steps (g >= num_blocks) from an uneven core split: skip compute.

    return kernel


def _mse_partial_sums(inputs, targets, mask):
    """float32 vector (K,): sum of squared errors of (x_k*mask - t) (or x_k - t),
    all K inputs fused into one Pallas call."""
    num_inputs = len(inputs)
    n = 1
    for s in targets.shape:
        n *= int(s)

    num_cores, stream_budget, vmem_limit = _tpu_config()

    n_main = _round_down(n, SUBLANE * LANE)
    rows = n_main // LANE

    flat_inputs = [x.reshape(-1) for x in inputs]
    flat_t = targets.reshape(-1)

    has_mask = mask is not None
    flat_m = None
    if has_mask:
        m = mask
        if m.shape != targets.shape:
            if m.size == targets.size:
                m = m.reshape(targets.shape)
            else:
                # TODO(synk): lower-rank broadcast masks are still materialized here; an
                # in-kernel broadcast would avoid streaming the extra N bytes of HBM.
                m = jnp.broadcast_to(m, targets.shape)
        if m.dtype == jnp.bool_:
            m = m.astype(jnp.int8)      # 1 B/elt on the wire; cast to f32 in-kernel
        flat_m = m.reshape(-1)

    # Ragged tail (< 1024 elements): tiny pure-JAX epilogue instead of a pad copy that
    # would re-read and re-write every stream once before the kernel.
    tail = None
    if n_main != n:
        t_tail = flat_t[n_main:].astype(jnp.float32)
        m_tail = flat_m[n_main:].astype(jnp.float32) if has_mask else None
        tails = []
        for x in flat_inputs:
            x_tail = x[n_main:].astype(jnp.float32)
            d = x_tail * m_tail - t_tail if has_mask else x_tail - t_tail
            tails.append(jnp.sum(d * d))
        tail = jnp.stack(tails)

    if rows == 0:
        return tail                      # everything fit in the epilogue (tiny input)

    def main_slab(flat):
        main = flat if n_main == n else flat[:n_main]
        return main.reshape(rows, LANE)  # lane-dense slab; free reshape when aligned

    streams = [main_slab(x) for x in flat_inputs]
    streams.append(main_slab(flat_t))
    if has_mask:
        streams.append(main_slab(flat_m))

    itemsizes = [jnp.dtype(s.dtype).itemsize for s in streams]
    bytes_per_row = LANE * sum(itemsizes)
    # Sub-32-bit streams pack along sublanes: coarser block-row granularity.
    granule = {4: SUBLANE, 2: 16, 1: 32}[min(itemsizes)]

    br_cap = max(granule,
                 _round_down(stream_budget // (2 * bytes_per_row), granule))
    br = min(MAX_BLOCK_ROWS, rows, br_cap)
    if br >= rows:
        br = rows                         # single full-extent block
    else:
        br = max(granule, _round_down(br, granule))

    num_blocks = -(-rows // br)
    rh = -(-num_blocks // num_cores)      # row-blocks per core
    has_partial_last = (rows % br != 0)
    has_overflow = (num_cores > 1) and (num_blocks % num_cores != 0)

    if num_cores > 1:
        if has_overflow:
            def stream_index_map(c, r):
                # Clamp overflow steps onto a valid block; their compute is skipped.
                return (jnp.minimum(c * rh + r, num_blocks - 1), 0)
        else:
            def stream_index_map(c, r):
                return (c * rh + r, 0)
        out_index_map = lambda c, r: (c, 0, 0, 0)
        grid = (num_cores, rh)
        core_sem = getattr(pltpu, "CORE_PARALLEL", None)
        if core_sem is not None:
            dim_sems = (core_sem, getattr(pltpu, "ARBITRARY", "arbitrary"))
        else:
            dim_sems = ("parallel", "arbitrary")
    else:
        stream_index_map = lambda r: (r, 0)
        out_index_map = lambda r: (0, 0, 0, 0)
        grid = (num_blocks,)
        dim_sems = ("arbitrary",)

    in_specs = [pl.BlockSpec((br, LANE), stream_index_map) for _ in streams]
    out_specs = pl.BlockSpec((1, num_inputs, SUBLANE, LANE), out_index_map)

    kernel = _make_mse_kernel(num_inputs, has_mask, br, rows, rh, num_cores,
                              num_blocks, has_partial_last, has_overflow)

    total_bytes = sum(int(s.size) * it for s, it in zip(streams, itemsizes))
    flops_per_elt = 4 if has_mask else 3
    cost = pl.CostEstimate(flops=flops_per_elt * n_main * num_inputs,
                           transcendentals=0,
                           bytes_accessed=int(total_bytes))

    cp_kwargs = dict(dimension_semantics=dim_sems)
    if vmem_limit is not None:
        cp_kwargs["vmem_limit_bytes"] = int(vmem_limit)

    out = pl.pallas_call(
        kernel,
        out_shape=jax.ShapeDtypeStruct(
            (num_cores, num_inputs, SUBLANE, LANE), jnp.float32),
        grid_spec=pltpu.PrefetchScalarGridSpec(
            num_scalar_prefetch=0,
            grid=grid,
            in_specs=in_specs,
            out_specs=out_specs,
        ),
        compiler_params=pltpu.CompilerParams(**cp_kwargs),
        cost_estimate=cost,
    )(*streams)

    sums = jnp.sum(out, axis=(0, 2, 3))   # tiny epilogue cross-lane reduce (K*8*128 floats)
    return sums + tail if tail is not None else sums


def mse_loss_forward(inputs, targets, mask=None, weights=None):
    """Reproduces MseLoss.forward: nn.MSELoss(size_average=False) i.e. SUM of squared
    errors; optional elementwise mask on inputs; optional per-input weights when
    `inputs` is a list; final division by targets.shape[0]."""
    is_list = isinstance(inputs, (list, tuple))
    input_list = list(inputs) if is_list else [inputs]

    partials = _mse_partial_sums(input_list, targets, mask)   # (K,) SSE per input

    if is_list and weights is not None:
        w = jnp.asarray(weights, dtype=jnp.float32)
        loss = jnp.sum(w * partials)
    else:
        loss = jnp.sum(partials)

    return loss / jnp.float32(targets.shape[0])


if __name__ == "__main__":
    key = jax.random.PRNGKey(0)
    k1, k2, k3, k4, k5, k6, k7 = jax.random.split(key, 7)

    # Small NCHW shapes consistent with a heatmap-regression loss.
    B, C, H, W = 2, 4, 16, 16
    x = jax.random.normal(k1, (B, C, H, W), dtype=jnp.float32)
    x2 = jax.random.normal(k2, (B, C, H, W), dtype=jnp.float32)
    t = jax.random.normal(k3, (B, C, H, W), dtype=jnp.float32)
    mask = (jax.random.uniform(k4, (B, C, H, W)) > 0.5).astype(jnp.float32)

    # 1) Single input, no mask (2-stream kernel).
    loss_single = mse_loss_forward(x, t)
    # 2) Single input with f32 mask (3-stream kernel).
    loss_masked = mse_loss_forward(x, t, mask=mask)
    # 3) List of inputs with weights and mask (fused 4-stream, intermediate supervision).
    loss_list = mse_loss_forward([x, x2], t, mask=mask, weights=[0.5, 1.0])
    # 4) Boolean mask streamed as int8 (1 B/elt) on a 32-row-aligned slab.
    xb = jax.random.normal(k5, (2, 8, 16, 16), dtype=jnp.float32)
    tb = jax.random.normal(k6, (2, 8, 16, 16), dtype=jnp.float32)
    mb = jax.random.uniform(k7, (2, 8, 16, 16)) > 0.5
    loss_bool = mse_loss_forward(xb, tb, mask=mb)
    # 5) Ragged numel (not a multiple of 1024): prefix kernel + pure-JAX tail epilogue.
    xr = jax.random.normal(k1, (2, 3, 15, 17), dtype=jnp.float32)
    tr = jax.random.normal(k2, (2, 3, 15, 17), dtype=jnp.float32)
    loss_ragged = mse_loss_forward(xr, tr)

    jax.block_until_ready(
        (loss_single, loss_masked, loss_list, loss_bool, loss_ragged))

    # Pure-JAX reference (sum-reduction MSE / batch).
    def ref(inp, tgt, m=None):
        y = inp * m if m is not None else inp
        return jnp.sum((y - tgt) ** 2) / tgt.shape[0]

    r_single = ref(x, t)
    r_masked = ref(x, t, mask)
    r_list = (0.5 * jnp.sum((x * mask - t) ** 2)
              + 1.0 * jnp.sum((x2 * mask - t) ** 2)) / t.shape[0]
    r_bool = ref(xb, tb, mb.astype(jnp.float32))
    r_ragged = ref(xr, tr)

    assert jnp.allclose(loss_single, r_single, rtol=1e-5, atol=1e-4)
    assert jnp.allclose(loss_masked, r_masked, rtol=1e-5, atol=1e-4)
    assert jnp.allclose(loss_list, r_list, rtol=1e-5, atol=1e-4)
    assert jnp.allclose(loss_bool, r_bool, rtol=1e-5, atol=1e-4)
    assert jnp.allclose(loss_ragged, r_ragged, rtol=1e-5, atol=1e-4)

    print("KERNEL_OK")
</pallas_src>

<mosaic_0001>
module attributes {stable_mosaic.version = 11 : i64} {
  func.func @kernel(%arg0: i32, %arg1: memref<16x128xf32, #tpu.memory_space<vmem>>, %arg2: memref<16x128xf32, #tpu.memory_space<vmem>>, %arg3: memref<1x1x8x128xf32, #tpu.memory_space<vmem>>) attributes {dimension_semantics = [#tpu.dimension_semantics<arbitrary>], iteration_bounds = array<i64: 1>, scalar_prefetch = 0 : i64, scratch_operands = 0 : i64, tpu.core_type = #tpu.core_type<tc>, window_params = [{transform_indices = @transform_0, window_bounds = array<i64: 16, 128>}, {transform_indices = @transform_1, window_bounds = array<i64: 16, 128>}, {pipeline_mode = #tpu.pipeline_mode<synchronous>, transform_indices = @transform_2, window_bounds = array<i64: 1, 1, 8, 128>}]} {
    %c0_i32 = arith.constant 0 : i32
    %0 = arith.cmpi eq, %arg0, %c0_i32 : i32
    %1 = arith.extui %0 : i1 to i32
    %c0_i32_0 = arith.constant 0 : i32
    %2 = arith.cmpi ne, %1, %c0_i32_0 : i32
    scf.if %2 {
      %cst_12 = arith.constant 0.000000e+00 : f32
      %15 = vector.broadcast %cst_12 : f32 to vector<1x1x8x128xf32>
      %c0_13 = arith.constant 0 : index
      %c0_14 = arith.constant 0 : index
      %c0_15 = arith.constant 0 : index
      %c0_16 = arith.constant 0 : index
      %16 = vector.load %arg3[%c0_13, %c0_14, %c0_15, %c0_16] : memref<1x1x8x128xf32, #tpu.memory_space<vmem>>, vector<1x1x8x128xf32>
      tpu.vector_store %arg3[%c0_13, %c0_14, %c0_15, %c0_16], %15 {strides = array<i32>} : memref<1x1x8x128xf32, #tpu.memory_space<vmem>>, vector<1x1x8x128xf32>,
    } else {
    }
    %c0 = arith.constant 0 : index
    %c0_1 = arith.constant 0 : index
    %3 = vector.load %arg2[%c0, %c0_1] : memref<16x128xf32, #tpu.memory_space<vmem>>, vector<16x128xf32>
    %c0_2 = arith.constant 0 : index
    %c0_3 = arith.constant 0 : index
    %4 = vector.load %arg1[%c0_2, %c0_3] : memref<16x128xf32, #tpu.memory_space<vmem>>, vector<16x128xf32>
    %5 = arith.subf %4, %3 : vector<16x128xf32>
    %6 = arith.mulf %5, %5 : vector<16x128xf32>
    %c0_4 = arith.constant 0 : index
    %c0_5 = arith.constant 0 : index
    %c0_6 = arith.constant 0 : index
    %c0_7 = arith.constant 0 : index
    %7 = vector.load %arg3[%c0_4, %c0_5, %c0_6, %c0_7] : memref<1x1x8x128xf32, #tpu.memory_space<vmem>>, vector<1x1x8x128xf32>
    %8 = vector.shape_cast %7 : vector<1x1x8x128xf32> to vector<8x128xf32>
    %9 = vector.shape_cast %6 : vector<16x128xf32> to vector<2x8x128xf32>
    %cst = arith.constant dense<0.000000e+00> : vector<8x128xf32>
    %10 = vector.multi_reduction <add>, %9, %cst [0] : vector<2x8x128xf32> to vector<8x128xf32>
    %11 = arith.addf %8, %10 : vector<8x128xf32>
    %c0_8 = arith.constant 0 : index
    %c0_9 = arith.constant 0 : index
    %c0_10 = arith.constant 0 : index
    %c0_11 = arith.constant 0 : index
    %12 = vector.load %arg3[%c0_8, %c0_9, %c0_10, %c0_11] : memref<1x1x8x128xf32, #tpu.memory_space<vmem>>, vector<1x1x8x128xf32>
    %13 = vector.shape_cast %12 : vector<1x1x8x128xf32> to vector<8x128xf32>
    %14 = vector.shape_cast %11 : vector<8x128xf32> to vector<1x1x8x128xf32>
    tpu.vector_store %arg3[%c0_8, %c0_9, %c0_10, %c0_11], %14 {strides = array<i32>} : memref<1x1x8x128xf32, #tpu.memory_space<vmem>>, vector<1x1x8x128xf32>,
    return
  }
  func.func @transform_0(%arg0: i32) -> (i32, i32) {
    %c0_i32 = arith.constant 0 : i32
    %c0_i32_0 = arith.constant 0 : i32
    return %arg0, %c0_i32 : i32, i32
  }
  func.func @transform_1(%arg0: i32) -> (i32, i32) {
    %c0_i32 = arith.constant 0 : i32
    %c0_i32_0 = arith.constant 0 : i32
    return %arg0, %c0_i32 : i32, i32
  }
  func.func @transform_2(%arg0: i32) -> (i32, i32, i32, i32) {
    %c0_i32 = arith.constant 0 : i32
    %c0_i32_0 = arith.constant 0 : i32
    %c0_i32_1 = arith.constant 0 : i32
    %c0_i32_2 = arith.constant 0 : i32
    %c0_i32_3 = arith.constant 0 : i32
    return %c0_i32, %c0_i32_0, %c0_i32_1, %c0_i32_2 : i32, i32, i32, i32
  }
}

</mosaic_0001>

<llo_original>
// kernel: tpu_custom_call.1
$region0: #{tpu_custom_call.1}
  #allocation0 [shape = 'u32[]', space=smem, size = 0x4, offset = 0x4, fixed_abs, tag = 'smem constant byte address 0x4 - core index']
  #allocation1 [shape = 'u32[144,128]{1,0:T(1,128)}', space=vmem, size = 0x12000, scoped, tag = 'internal scratch']
  %s0 = inlined_call_operand.hbm [shape: f32[16,128], index: 0, kind: input, shape index: {}]
  %s1 = inlined_call_operand.hbm [shape: f32[16,128], index: 1, kind: input, shape index: {}]
  %s2 = inlined_call_operand.hbm [shape: f32[1,1,8,128], index: 2, kind: output, shape index: {}]
  %s3 = sld [smem:[#allocation0]]
  $region30: #{tpu_custom_call.1} parent=0
    _
  %s5 = ssub.s32 1, %s3
  %s6 = scalar_select 0, %s5, %s3
  $region1: #{tpu_custom_call.1} parent=0
    #allocation2 [shape = 'u8[8192]{0}', space=vmem, size = 0x2000, scoped, tag = 'input window, operand 0, single buffered']
    #allocation3 [shape = 's32[1]{0}', space=sflag, size = 0x4, scoped, tag = 'scoped memory for tpu_custom_call.1']
    #allocation4 [shape = 's32[1]{0}', space=sflag, size = 0x4, scoped, tag = 'scoped memory for tpu_custom_call.1']
    #allocation5 [shape = 'u8[8192]{0}', space=vmem, size = 0x2000, scoped, tag = 'input window, operand 1, single buffered']
    #allocation6 [shape = 's32[1]{0}', space=sflag, size = 0x4, scoped, tag = 'scoped memory for tpu_custom_call.1']
    #allocation7 [shape = 'u8[4096]{0}', space=vmem, size = 0x1000, scoped, tag = 'output window, operand 0, single buffered']
    %7 = vsyncpa [#allocation3], 0
    %8 = vsyncpa [#allocation6], 0
    %9 = vsyncpa [#allocation4], 0
    // Predicated region
    $region2: #{tpu_custom_call.1} parent=1 // pred_check
      _
    $region3: #{tpu_custom_call.1} parent=1 // pred_check_branch
      %11 = sbr.rel (0) target = $region5
    $region4: #{tpu_custom_call.1} parent=1 // pred_region
      %s13 = ssub.s32 256, 256
      %14 = vsyncadd [#allocation3], %s13
      %s15 = sshll.u32 [#allocation2], 4
      %s16 = int_to_ptr.vmem [resolvable:$true] %s15
      %21 = dma.hbm_to_vmem [thread:$0]  %s0, 256, %s16, [#allocation3], 128, 128, 8
    $region5: #{tpu_custom_call.1} parent=1 // pred_fallthru
      _
    // Predicated region
    $region6: #{tpu_custom_call.1} parent=1 // pred_check
      _
    $region7: #{tpu_custom_call.1} parent=1 // pred_check_branch
      %23 = sbr.rel (0) target = $region9
    $region8: #{tpu_custom_call.1} parent=1 // pred_region
      %s25 = ssub.s32 256, 256
      %26 = vsyncadd [#allocation6], %s25
      %s27 = sshll.u32 [#allocation5], 4
      %s28 = int_to_ptr.vmem [resolvable:$true] %s27
      %33 = dma.hbm_to_vmem [thread:$0]  %s1, 256, %s28, [#allocation6], 128, 128, 8
    $region9: #{tpu_custom_call.1} parent=1 // pred_fallthru
      _
    // Predicated region
    $region10: #{tpu_custom_call.1} parent=1 // pred_check
      _
    $region11: #{tpu_custom_call.1} parent=1 // pred_check_branch
      %35 = sbr.rel (0) target = $region13
    $region12: #{tpu_custom_call.1} parent=1 // pred_region
      %36 = dma.done [#allocation3], 256
    $region13: #{tpu_custom_call.1} parent=1 // pred_fallthru
      _
    // Predicated region
    $region14: #{tpu_custom_call.1} parent=1 // pred_check
      _
    $region15: #{tpu_custom_call.1} parent=1 // pred_check_branch
      %38 = sbr.rel (0) target = $region17
    $region16: #{tpu_custom_call.1} parent=1 // pred_region
      %39 = dma.done [#allocation6], 256
    $region17: #{tpu_custom_call.1} parent=1 // pred_fallthru
      _
    %p40 = scmp.eq.s32.totalorder 0, 0
    // Predicated region
    $region18: #{tpu_custom_call.1} parent=1 // pred_check
      %p41 = pneg %p40
    $region19: #{tpu_custom_call.1} parent=1 // pred_check_branch
      %43 = sbr.rel (%p41) target = $region21
    $region20: #{tpu_custom_call.1} parent=1 // pred_region
      %44 = vst [vmem:[#allocation7] sm:$0xff] 0.0
    $region21: #{tpu_custom_call.1} parent=1 // pred_fallthru
      _
    %v45 = vld [vmem:[#allocation5] sm:$0xff]
    %v46 = vld [vmem:[#allocation5 + $0x8] sm:$0xff]
    %v47 = vld [vmem:[#allocation2] sm:$0xff]
    %v48 = vld [vmem:[#allocation2 + $0x8] sm:$0xff]
    %v49 = vsub.f32 %v47, %v45
    %v50 = vsub.f32 %v48, %v46
    %v51 = vmul.f32 %v49, %v49
    %v52 = vmul.f32 %v50, %v50
    %v53 = vld [vmem:[#allocation7] sm:$0xff]
    %v54 = vadd.f32 %v51, %v52
    %v55 = vadd.f32 %v53, %v54
    %56 = vst [vmem:[#allocation7] sm:$0xff] %v55
    // Predicated region
    $region22: #{tpu_custom_call.1} parent=1 // pred_check
      _
    $region23: #{tpu_custom_call.1} parent=1 // pred_check_branch
      %58 = sbr.rel (0) target = $region25
    $region24: #{tpu_custom_call.1} parent=1 // pred_region
      %s60 = ssub.s32 128, 128
      %61 = vsyncadd [#allocation4], %s60
      %s63 = sshll.u32 [#allocation7], 4
      %s64 = int_to_ptr.vmem [resolvable:$true] %s63
      %66 = dma.vmem_to_hbm [thread:$0]  %s64, 128, %s2, [#allocation4]
    $region25: #{tpu_custom_call.1} parent=1 // pred_fallthru
      _
    // Predicated region
    $region26: #{tpu_custom_call.1} parent=1 // pred_check
      _
    $region27: #{tpu_custom_call.1} parent=1 // pred_check_branch
      %68 = sbr.rel (0) target = $region29
    $region28: #{tpu_custom_call.1} parent=1 // pred_region
      %69 = dma.done [#allocation4], 128
    $region29: #{tpu_custom_call.1} parent=1 // pred_fallthru
      _
    %70 = vsyncpa [#allocation3], 1
    %71 = vsyncpa [#allocation6], 1
    %72 = vsyncpa [#allocation4], 1

</llo_original>
